<compile_context>
chip_gen: v7x
topology: tpu7x:2x2x1
jax: 0.10.0
libtpu: 0.0.40
codegen_flags: <defaults>
</compile_context>

<pallas_src>
import numpy as np
import jax
import jax.numpy as jnp
from jax import lax
from jax.experimental import pallas as pl
from jax.experimental.pallas import tpu as pltpu

IGNORE_LABEL = 77
NEG_BIG = -1e30  # sentinel margin for ignored pixels (sorts last, relu -> 0)


def _lovasz_kernel(m_ref, g_ref, out_ref):
    # m_ref: (1, 1, N) margins sorted descending (ignored -> NEG_BIG, at tail)
    # g_ref: (1, 1, N) 0/1 labels in the same sorted order (0 where ignored)
    # out_ref: (1, 1, 1) per-sample loss
    m = m_ref[0]  # (1, N)
    g = g_ref[0]  # (1, N)
    N = m.shape[-1]

    lane = lax.broadcasted_iota(jnp.int32, (1, N), 1)

    # Validity derived in-kernel from the sentinel (saves one (B,N) input DMA).
    valid = (m > NEG_BIG * 0.5).astype(jnp.float32)

    # Inclusive prefix sum of g along lanes: log2(N) roll-and-masked-add scan.
    cum_gt = g
    d = 1
    while d < N:
        shifted = pltpu.roll(cum_gt, shift=d, axis=1)
        cum_gt = cum_gt + jnp.where(lane >= d, shifted, 0.0)
        d *= 2

    n_valid = jnp.sum(valid, axis=-1, keepdims=True)  # (1, 1)
    gts = jnp.sum(g, axis=-1, keepdims=True)          # (1, 1) total positives

    # Ignored pixels are all at the tail of the descending sort, so
    # cumsum(valid)[i] = min(i+1, n_valid)  (closed form, no second scan).
    cum_valid = jnp.minimum((lane + 1).astype(jnp.float32), n_valid)
    cum_not = cum_valid - cum_gt                       # cumsum(1 - gt) over valid

    intersection = gts - cum_gt
    union = gts + cum_not
    # union >= 1 whenever the sample has any valid pixel; clamping to 1 both
    # avoids 1/0 and makes an all-ignored sample contribute exactly 0.
    union_safe = jnp.maximum(union, 1.0)
    jaccard = 1.0 - intersection * pl.reciprocal(union_safe, approx=False)

    # grad[0] = jaccard[0]; grad[k] = jaccard[k] - jaccard[k-1]  (k >= 1)
    prev = pltpu.roll(jaccard, shift=1, axis=1)
    prev = jnp.where(lane == 0, 0.0, prev)
    grad = jaccard - prev

    relu_m = jnp.maximum(m, 0.0)  # 0 at ignored positions
    out_ref[0] = jnp.sum(relu_m * grad, axis=-1, keepdims=True)


def lovasz_loss(inputs, labels):
    """inputs: (B, C, H, W) float32; labels: (B, H, W) int32. Returns scalar loss."""
    logits = inputs[:, 1, :, :]                       # take channel 1, as in forward()
    B, H, W = logits.shape
    N = H * W

    logit = logits.reshape(B, N).astype(jnp.float32)
    label = labels.reshape(B, N)
    valid = label != IGNORE_LABEL
    target = jnp.where(valid, label, 0).astype(jnp.float32)   # 0/1 labels (0 where ignored)
    signs = 2.0 * target - 1.0
    margins = 1.0 - logit * signs
    margins = jnp.where(valid, margins, NEG_BIG)

    # TODO(synk): descending sort has no clean Pallas TPU equivalent; done as a
    # single fused key/value lax.sort (replaces argsort + 3 gathers).
    neg_m_sorted, g_sorted = lax.sort((-margins, target), dimension=-1,
                                      is_stable=True, num_keys=1)
    m_sorted = (-neg_m_sorted).reshape(B, 1, N)
    g_sorted = g_sorted.reshape(B, 1, N)

    per_sample = pl.pallas_call(
        _lovasz_kernel,
        out_shape=jax.ShapeDtypeStruct((B, 1, 1), jnp.float32),
        grid=(B,),
        in_specs=[
            pl.BlockSpec((1, 1, N), lambda b: (b, 0, 0)),
            pl.BlockSpec((1, 1, N), lambda b: (b, 0, 0)),
        ],
        out_specs=pl.BlockSpec((1, 1, 1), lambda b: (b, 0, 0)),
        compiler_params=pltpu.CompilerParams(dimension_semantics=("parallel",)),
    )(m_sorted, g_sorted)

    # forward(): single sample -> its loss; batch -> mean of per-sample losses.
    return jnp.mean(per_sample)


def _reference(inputs, labels):
    """Pure numpy/float64 reproduction of the PyTorch forward (prox=False)."""
    inputs = np.asarray(inputs)
    labels = np.asarray(labels)
    logits = inputs[:, 1, :, :]
    losses = []
    for logit, label in zip(logits, labels):
        lab = label.reshape(-1)
        lg = logit.reshape(-1)
        mask = lab != IGNORE_LABEL
        tgt = lab[mask].astype(np.float64)
        lg = lg[mask].astype(np.float64)
        signs = 2.0 * tgt - 1.0
        margins = 1.0 - lg * signs
        perm = np.argsort(-margins, kind="stable")
        ms = margins[perm]
        gt = tgt[perm]
        gts = gt.sum()
        inter = gts - np.cumsum(gt)
        union = gts + np.cumsum(1.0 - gt)
        jac = 1.0 - inter / union
        jac[1:] = jac[1:] - jac[:-1]
        losses.append(float(np.dot(np.maximum(ms, 0.0), jac)))
    return float(np.mean(losses))


if __name__ == "__main__":
    key = jax.random.PRNGKey(0)
    k1, k2, k3 = jax.random.split(key, 3)
    B, C, H, W = 2, 4, 16, 16

    x = jax.random.normal(k1, (B, C, H, W), dtype=jnp.float32)
    labels = (jax.random.uniform(k2, (B, H, W)) > 0.5).astype(jnp.int32)
    # sprinkle some ignore-index (77) pixels, as the module supports
    ignore = jax.random.uniform(k3, (B, H, W)) < 0.1
    labels = jnp.where(ignore, IGNORE_LABEL, labels)

    loss = lovasz_loss(x, labels)
    loss = jax.block_until_ready(loss)

    ref = _reference(x, labels)
    assert np.isfinite(float(loss)), f"non-finite loss: {loss}"
    assert abs(float(loss) - ref) <= 1e-3 * (abs(ref) + 1.0), (float(loss), ref)
    print("KERNEL_OK")
</pallas_src>

<mosaic_0001>
module attributes {stable_mosaic.version = 11 : i64} {
  func.func @_lovasz_kernel(%arg0: i32, %arg1: memref<1x1x256xf32, #tpu.memory_space<vmem>>, %arg2: memref<1x1x256xf32, #tpu.memory_space<vmem>>, %arg3: memref<1x1x1xf32, #tpu.memory_space<vmem>>) attributes {dimension_semantics = [#tpu.dimension_semantics<parallel>], iteration_bounds = array<i64: 2>, scalar_prefetch = 0 : i64, scratch_operands = 0 : i64, tpu.core_type = #tpu.core_type<tc>, window_params = [{transform_indices = @transform_0, window_bounds = array<i64: 1, 1, 256>}, {transform_indices = @transform_1, window_bounds = array<i64: 1, 1, 256>}, {transform_indices = @transform_2, window_bounds = array<i64: 1, 1, 1>}]} {
    %c0 = arith.constant 0 : index
    %c0_0 = arith.constant 0 : index
    %c0_1 = arith.constant 0 : index
    %0 = vector.load %arg1[%c0, %c0_0, %c0_1] : memref<1x1x256xf32, #tpu.memory_space<vmem>>, vector<1x1x256xf32>
    %1 = vector.shape_cast %0 : vector<1x1x256xf32> to vector<1x256xf32>
    %c0_2 = arith.constant 0 : index
    %c0_3 = arith.constant 0 : index
    %c0_4 = arith.constant 0 : index
    %2 = vector.load %arg2[%c0_2, %c0_3, %c0_4] : memref<1x1x256xf32, #tpu.memory_space<vmem>>, vector<1x1x256xf32>
    %3 = vector.shape_cast %2 : vector<1x1x256xf32> to vector<1x256xf32>
    %4 = tpu.iota {dimensions = array<i32: 1>} : vector<1x256xi32>
    %cst = arith.constant -5.000000e+29 : f32
    %5 = vector.broadcast %cst : f32 to vector<1x256xf32>
    %6 = arith.cmpf ogt, %1, %5 : vector<1x256xf32>
    %7 = arith.extui %6 : vector<1x256xi1> to vector<1x256xi32>
    %8 = arith.sitofp %7 : vector<1x256xi32> to vector<1x256xf32>
    %c1_i32 = arith.constant 1 : i32
    %9 = tpu.dynamic_rotate %3 by %c1_i32 dim 1 : vector<1x256xf32>, i32 -> vector<1x256xf32>
    %c1_i32_5 = arith.constant 1 : i32
    %10 = vector.broadcast %c1_i32_5 : i32 to vector<1x256xi32>
    %11 = arith.cmpi sge, %4, %10 : vector<1x256xi32>
    %cst_6 = arith.constant 0.000000e+00 : f32
    %12 = vector.broadcast %cst_6 : f32 to vector<1x256xf32>
    %13 = arith.select %11, %9, %12 : vector<1x256xi1>, vector<1x256xf32>
    %14 = arith.addf %3, %13 : vector<1x256xf32>
    %c2_i32 = arith.constant 2 : i32
    %15 = tpu.dynamic_rotate %14 by %c2_i32 dim 1 : vector<1x256xf32>, i32 -> vector<1x256xf32>
    %c2_i32_7 = arith.constant 2 : i32
    %16 = vector.broadcast %c2_i32_7 : i32 to vector<1x256xi32>
    %17 = arith.cmpi sge, %4, %16 : vector<1x256xi32>
    %cst_8 = arith.constant 0.000000e+00 : f32
    %18 = vector.broadcast %cst_8 : f32 to vector<1x256xf32>
    %19 = arith.select %17, %15, %18 : vector<1x256xi1>, vector<1x256xf32>
    %20 = arith.addf %14, %19 : vector<1x256xf32>
    %c4_i32 = arith.constant 4 : i32
    %21 = tpu.dynamic_rotate %20 by %c4_i32 dim 1 : vector<1x256xf32>, i32 -> vector<1x256xf32>
    %c4_i32_9 = arith.constant 4 : i32
    %22 = vector.broadcast %c4_i32_9 : i32 to vector<1x256xi32>
    %23 = arith.cmpi sge, %4, %22 : vector<1x256xi32>
    %cst_10 = arith.constant 0.000000e+00 : f32
    %24 = vector.broadcast %cst_10 : f32 to vector<1x256xf32>
    %25 = arith.select %23, %21, %24 : vector<1x256xi1>, vector<1x256xf32>
    %26 = arith.addf %20, %25 : vector<1x256xf32>
    %c8_i32 = arith.constant 8 : i32
    %27 = tpu.dynamic_rotate %26 by %c8_i32 dim 1 : vector<1x256xf32>, i32 -> vector<1x256xf32>
    %c8_i32_11 = arith.constant 8 : i32
    %28 = vector.broadcast %c8_i32_11 : i32 to vector<1x256xi32>
    %29 = arith.cmpi sge, %4, %28 : vector<1x256xi32>
    %cst_12 = arith.constant 0.000000e+00 : f32
    %30 = vector.broadcast %cst_12 : f32 to vector<1x256xf32>
    %31 = arith.select %29, %27, %30 : vector<1x256xi1>, vector<1x256xf32>
    %32 = arith.addf %26, %31 : vector<1x256xf32>
    %c16_i32 = arith.constant 16 : i32
    %33 = tpu.dynamic_rotate %32 by %c16_i32 dim 1 : vector<1x256xf32>, i32 -> vector<1x256xf32>
    %c16_i32_13 = arith.constant 16 : i32
    %34 = vector.broadcast %c16_i32_13 : i32 to vector<1x256xi32>
    %35 = arith.cmpi sge, %4, %34 : vector<1x256xi32>
    %cst_14 = arith.constant 0.000000e+00 : f32
    %36 = vector.broadcast %cst_14 : f32 to vector<1x256xf32>
    %37 = arith.select %35, %33, %36 : vector<1x256xi1>, vector<1x256xf32>
    %38 = arith.addf %32, %37 : vector<1x256xf32>
    %c32_i32 = arith.constant 32 : i32
    %39 = tpu.dynamic_rotate %38 by %c32_i32 dim 1 : vector<1x256xf32>, i32 -> vector<1x256xf32>
    %c32_i32_15 = arith.constant 32 : i32
    %40 = vector.broadcast %c32_i32_15 : i32 to vector<1x256xi32>
    %41 = arith.cmpi sge, %4, %40 : vector<1x256xi32>
    %cst_16 = arith.constant 0.000000e+00 : f32
    %42 = vector.broadcast %cst_16 : f32 to vector<1x256xf32>
    %43 = arith.select %41, %39, %42 : vector<1x256xi1>, vector<1x256xf32>
    %44 = arith.addf %38, %43 : vector<1x256xf32>
    %c64_i32 = arith.constant 64 : i32
    %45 = tpu.dynamic_rotate %44 by %c64_i32 dim 1 : vector<1x256xf32>, i32 -> vector<1x256xf32>
    %c64_i32_17 = arith.constant 64 : i32
    %46 = vector.broadcast %c64_i32_17 : i32 to vector<1x256xi32>
    %47 = arith.cmpi sge, %4, %46 : vector<1x256xi32>
    %cst_18 = arith.constant 0.000000e+00 : f32
    %48 = vector.broadcast %cst_18 : f32 to vector<1x256xf32>
    %49 = arith.select %47, %45, %48 : vector<1x256xi1>, vector<1x256xf32>
    %50 = arith.addf %44, %49 : vector<1x256xf32>
    %c128_i32 = arith.constant 128 : i32
    %51 = tpu.dynamic_rotate %50 by %c128_i32 dim 1 : vector<1x256xf32>, i32 -> vector<1x256xf32>
    %c128_i32_19 = arith.constant 128 : i32
    %52 = vector.broadcast %c128_i32_19 : i32 to vector<1x256xi32>
    %53 = arith.cmpi sge, %4, %52 : vector<1x256xi32>
    %cst_20 = arith.constant 0.000000e+00 : f32
    %54 = vector.broadcast %cst_20 : f32 to vector<1x256xf32>
    %55 = arith.select %53, %51, %54 : vector<1x256xi1>, vector<1x256xf32>
    %56 = arith.addf %50, %55 : vector<1x256xf32>
    %cst_21 = arith.constant dense<0.000000e+00> : vector<1xf32>
    %57 = vector.multi_reduction <add>, %8, %cst_21 [1] : vector<1x256xf32> to vector<1xf32>
    %58 = vector.shape_cast %57 : vector<1xf32> to vector<1x1xf32>
    %cst_22 = arith.constant dense<0.000000e+00> : vector<1xf32>
    %59 = vector.multi_reduction <add>, %3, %cst_22 [1] : vector<1x256xf32> to vector<1xf32>
    %60 = vector.shape_cast %59 : vector<1xf32> to vector<1x1xf32>
    %c1_i32_23 = arith.constant 1 : i32
    %61 = vector.broadcast %c1_i32_23 : i32 to vector<1x256xi32>
    %62 = arith.addi %4, %61 : vector<1x256xi32>
    %63 = arith.sitofp %62 : vector<1x256xi32> to vector<1x256xf32>
    %64 = vector.broadcast %58 : vector<1x1xf32> to vector<1x256xf32>
    %65 = arith.minimumf %63, %64 : vector<1x256xf32>
    %66 = arith.subf %65, %56 : vector<1x256xf32>
    %67 = vector.broadcast %60 : vector<1x1xf32> to vector<1x256xf32>
    %68 = arith.subf %67, %56 : vector<1x256xf32>
    %69 = vector.broadcast %60 : vector<1x1xf32> to vector<1x256xf32>
    %70 = arith.addf %69, %66 : vector<1x256xf32>
    %cst_24 = arith.constant 1.000000e+00 : f32
    %71 = vector.broadcast %cst_24 : f32 to vector<1x256xf32>
    %72 = arith.maximumf %70, %71 : vector<1x256xf32>
    %73 = tpu.reciprocal %72 : vector<1x256xf32> -> vector<1x256xf32>
    %74 = arith.mulf %68, %73 : vector<1x256xf32>
    %cst_25 = arith.constant 1.000000e+00 : f32
    %75 = vector.broadcast %cst_25 : f32 to vector<1x256xf32>
    %76 = arith.subf %75, %74 : vector<1x256xf32>
    %c1_i32_26 = arith.constant 1 : i32
    %77 = tpu.dynamic_rotate %76 by %c1_i32_26 dim 1 : vector<1x256xf32>, i32 -> vector<1x256xf32>
    %c0_i32 = arith.constant 0 : i32
    %78 = vector.broadcast %c0_i32 : i32 to vector<1x256xi32>
    %79 = arith.cmpi eq, %4, %78 : vector<1x256xi32>
    %cst_27 = arith.constant 0.000000e+00 : f32
    %80 = vector.broadcast %cst_27 : f32 to vector<1x256xf32>
    %81 = arith.select %79, %80, %77 : vector<1x256xi1>, vector<1x256xf32>
    %82 = arith.subf %76, %81 : vector<1x256xf32>
    %cst_28 = arith.constant 0.000000e+00 : f32
    %83 = vector.broadcast %cst_28 : f32 to vector<1x256xf32>
    %84 = arith.maximumf %1, %83 : vector<1x256xf32>
    %85 = arith.mulf %84, %82 : vector<1x256xf32>
    %cst_29 = arith.constant dense<0.000000e+00> : vector<1xf32>
    %86 = vector.multi_reduction <add>, %85, %cst_29 [1] : vector<1x256xf32> to vector<1xf32>
    %87 = vector.shape_cast %86 : vector<1xf32> to vector<1x1xf32>
    %c0_30 = arith.constant 0 : index
    %c0_31 = arith.constant 0 : index
    %c0_32 = arith.constant 0 : index
    %88 = vector.load %arg3[%c0_30, %c0_31, %c0_32] : memref<1x1x1xf32, #tpu.memory_space<vmem>>, vector<1x1x1xf32>
    %89 = vector.shape_cast %88 : vector<1x1x1xf32> to vector<1x1xf32>
    %90 = vector.shape_cast %87 : vector<1x1xf32> to vector<1x1x1xf32>
    tpu.vector_store %arg3[%c0_30, %c0_31, %c0_32], %90 {strides = array<i32>} : memref<1x1x1xf32, #tpu.memory_space<vmem>>, vector<1x1x1xf32>,
    return
  }
  func.func @transform_0(%arg0: i32) -> (i32, i32, i32) {
    %c0_i32 = arith.constant 0 : i32
    %c0_i32_0 = arith.constant 0 : i32
    %c0_i32_1 = arith.constant 0 : i32
    return %arg0, %c0_i32, %c0_i32_0 : i32, i32, i32
  }
  func.func @transform_1(%arg0: i32) -> (i32, i32, i32) {
    %c0_i32 = arith.constant 0 : i32
    %c0_i32_0 = arith.constant 0 : i32
    %c0_i32_1 = arith.constant 0 : i32
    return %arg0, %c0_i32, %c0_i32_0 : i32, i32, i32
  }
  func.func @transform_2(%arg0: i32) -> (i32, i32, i32) {
    %c0_i32 = arith.constant 0 : i32
    %c0_i32_0 = arith.constant 0 : i32
    %c0_i32_1 = arith.constant 0 : i32
    return %arg0, %c0_i32, %c0_i32_0 : i32, i32, i32
  }
}

</mosaic_0001>

<llo_original>
// kernel: tpu_custom_call.1
$region0: #{tpu_custom_call.1}
  #allocation0 [shape = 'u32[]', space=smem, size = 0x4, offset = 0x4, fixed_abs, tag = 'smem constant byte address 0x4 - core index']
  #allocation1 [shape = 'u32[144,128]{1,0:T(1,128)}', space=vmem, size = 0x12000, scoped, tag = 'internal scratch']
  %s0 = inlined_call_operand.hbm [shape: f32[2,1,256], index: 0, kind: input, shape index: {}]
  %s1 = inlined_call_operand.hbm [shape: f32[2,1,256], index: 1, kind: input, shape index: {}]
  %s2 = inlined_call_operand.vmem [shape: f32[2,1,1], index: 2, kind: output, shape index: {}]
  %s3 = sld [smem:[#allocation0]]
  $region49: #{tpu_custom_call.1} parent=0
    _
  %s5 = ssub.s32 1, %s3
  %s6 = scalar_select 0, %s5, %s3
  $region1: #{tpu_custom_call.1} parent=0
    #allocation2 [shape = 'u8[2048]{0}', space=vmem, size = 0x800, scoped, tag = 'input window, operand 0']
    #allocation3 [shape = 's32[2]{0}', space=sflag, size = 0x8, scoped, tag = 'scoped memory for tpu_custom_call.1']
    #allocation4 [shape = 'u8[2048]{0}', space=vmem, size = 0x800, scoped, tag = 'input window, operand 1']
    #allocation5 [shape = 's32[2]{0}', space=sflag, size = 0x8, scoped, tag = 'scoped memory for tpu_custom_call.1']
    %7 = vsyncpa [#allocation3], 0
    %s8 = scalar_lea.sflag [#allocation3], 1
    %9 = vsyncpa %s8, 0
    %10 = vsyncpa [#allocation5], 0
    %s11 = scalar_lea.sflag [#allocation5], 1
    %12 = vsyncpa %s11, 0
    loop: start=0, step=1, limit=4
    $region2: #{tpu_custom_call.1} parent=1 // loop_pre_header
      _
    $region3: #{tpu_custom_call.1} parent=1 // loop_header
      %s14 = sphi 0, %s18
      %p15 = scmp.ge.s32.totalorder %s14, 4
      %s24 = sphi 0, %s26
      %s27 = sphi 0, %s24
      %s28 = sphi 0, %s27
      %s44 = sphi 0, %s28
      %s50 = sphi 0, %s52
      %s53 = sphi 0, %s50
      %s54 = sphi 0, %s53
      %s70 = sphi 0, %s54
      %s76 = sphi 0, %s78
      %s79 = sphi 0, %s76
      %s80 = sphi 0, %s79
      %s96 = sphi 0, %s80
    $region4: #{tpu_custom_call.1} parent=1 // loop_header_branch
      %17 = sbr.rel (%p15) target = $region8
    $region5: #{tpu_custom_call.1} parent=1 // loop_body
      %s19 = ssub.s32 %s14, 1
      %s20 = ssub.s32 %s14, 2
      %s21 = sadd.s32 %s14, 1
      %s22 = ssub.s32 %s14, %s21
      %p23 = scmp.eq.s32.totalorder %s22, 0
      %s25 = sadd.s32 %s24, 1
      %s26 = scalar_select %p23, %s24, %s25
      %p29 = pneg %p23
      %p30 = scmp.eq.s32.totalorder %s14, 1
      %p31 = por %p29, %p30
      %p32 = scmp.ne.s32.totalorder %s24, %s27
      %p33 = scmp.eq.s32.totalorder %s14, 0
      %p34 = por %p32, %p33
      %p35 = scmp.ne.s32.totalorder %s24, %s27
      %p36 = scmp.eq.s32.totalorder %s19, 1
      %p37 = por %p35, %p36
      %p38 = scmp.ne.s32.totalorder %s27, %s28
      %p39 = scmp.eq.s32.totalorder %s19, 0
      %p40 = por %p38, %p39
      %p41 = scmp.ne.s32.totalorder %s27, %s28
      %p42 = scmp.eq.s32.totalorder %s20, 1
      %p43 = por %p41, %p42
      %p45 = scmp.ne.s32.totalorder %s28, %s44
      %p46 = scmp.eq.s32.totalorder %s20, 0
      %p47 = por %p45, %p46
      %s48 = ssub.s32 %s14, %s21
      %p49 = scmp.eq.s32.totalorder %s48, 0
      %s51 = sadd.s32 %s50, 1
      %s52 = scalar_select %p49, %s50, %s51
      %p55 = pneg %p49
      %p56 = scmp.eq.s32.totalorder %s14, 1
      %p57 = por %p55, %p56
      %p58 = scmp.ne.s32.totalorder %s50, %s53
      %p59 = scmp.eq.s32.totalorder %s14, 0
      %p60 = por %p58, %p59
      %p61 = scmp.ne.s32.totalorder %s50, %s53
      %p62 = scmp.eq.s32.totalorder %s19, 1
      %p63 = por %p61, %p62
      %p64 = scmp.ne.s32.totalorder %s53, %s54
      %p65 = scmp.eq.s32.totalorder %s19, 0
      %p66 = por %p64, %p65
      %p67 = scmp.ne.s32.totalorder %s53, %s54
      %p68 = scmp.eq.s32.totalorder %s20, 1
      %p69 = por %p67, %p68
      %p71 = scmp.ne.s32.totalorder %s54, %s70
      %p72 = scmp.eq.s32.totalorder %s20, 0
      %p73 = por %p71, %p72
      %s74 = ssub.s32 %s14, %s21
      %p75 = scmp.eq.s32.totalorder %s74, 0
      %s77 = sadd.s32 %s76, 1
      %s78 = scalar_select %p75, %s76, %s77
      %p81 = pneg %p75
      %p82 = scmp.eq.s32.totalorder %s14, 1
      %p83 = por %p81, %p82
      %p84 = scmp.ne.s32.totalorder %s76, %s79
      %p85 = scmp.eq.s32.totalorder %s14, 0
      %p86 = por %p84, %p85
      %p87 = scmp.ne.s32.totalorder %s76, %s79
      %p88 = scmp.eq.s32.totalorder %s19, 1
      %p89 = por %p87, %p88
      %p90 = scmp.ne.s32.totalorder %s79, %s80
      %p91 = scmp.eq.s32.totalorder %s19, 0
      %p92 = por %p90, %p91
      %p93 = scmp.ne.s32.totalorder %s79, %s80
      %p94 = scmp.eq.s32.totalorder %s20, 1
      %p95 = por %p93, %p94
      %p97 = scmp.ne.s32.totalorder %s80, %s96
      %p98 = scmp.eq.s32.totalorder %s20, 0
      %p99 = por %p97, %p98
      %p100 = scmp.le.s32.totalorder 1, %s14
      %p101 = scmp.lt.s32.totalorder %s14, 3
      %p102 = pnand %p100, %p101
      %p103 = pneg %p102
      // Predicated region
      $region9: #{tpu_custom_call.1} parent=5 // pred_check
        _
      $region10: #{tpu_custom_call.1} parent=5 // pred_check_branch
        %105 = sbr.rel (%p102) target = $region12
      $region11: #{tpu_custom_call.1} parent=5 // pred_region
        %s106 = ssub.s32 %s14, 1
      $region12: #{tpu_custom_call.1} parent=5 // pred_fallthru
        _
      %p107 = scmp.lt.s32.totalorder %s14, 2
      // Predicated region
      $region13: #{tpu_custom_call.1} parent=5 // pred_check
        %p108 = pneg %p107
      $region14: #{tpu_custom_call.1} parent=5 // pred_check_branch
        %110 = sbr.rel (%p108) target = $region16
      $region15: #{tpu_custom_call.1} parent=5 // pred_region
        // Predicated region
        $region17: #{tpu_custom_call.1} parent=15 // pred_check
          %p111 = pneg %p34
        $region18: #{tpu_custom_call.1} parent=15 // pred_check_branch
          %113 = sbr.rel (%p111) target = $region20
        $region19: #{tpu_custom_call.1} parent=15 // pred_region
          %s114 = sand.u32 %s24, 1
          %s115 = scalar_lea.sflag [#allocation3], %s114
          %s116 = sand.u32 %s24, 1
          %s117 = smul.addr %s116, 2
          %s118 = scalar_lea.vmem [#allocation2], %s117
          %s120 = ssub.s32 32, 32
          %121 = vsyncadd %s115, %s120
          %s122 = smul.addr %s14, 2
          %s123 = smul.addr %s122, 16
          %s124 = scalar_lea.hbm %s0, %s123
          %s126 = sshll.u32 %s118, 4
          %s127 = int_to_ptr.vmem [resolvable:$true] %s126
          %129 = dma.hbm_to_vmem [thread:$0]  %s124, 32, %s127, %s115
        $region20: #{tpu_custom_call.1} parent=15 // pred_fallthru
          _
        // Predicated region
        $region21: #{tpu_custom_call.1} parent=15 // pred_check
          %p130 = pneg %p60
        $region22: #{tpu_custom_call.1} parent=15 // pred_check_branch
          %132 = sbr.rel (%p130) target = $region24
        $region23: #{tpu_custom_call.1} parent=15 // pred_region
          %s133 = sand.u32 %s50, 1
          %s134 = scalar_lea.sflag [#allocation5], %s133
          %s135 = sand.u32 %s50, 1
          %s136 = smul.addr %s135, 2
          %s137 = scalar_lea.vmem [#allocation4], %s136
          %s139 = ssub.s32 32, 32
          %140 = vsyncadd %s134, %s139
          %s141 = smul.addr %s14, 2
          %s142 = smul.addr %s141, 16
          %s143 = scalar_lea.hbm %s1, %s142
          %s145 = sshll.u32 %s137, 4
          %s146 = int_to_ptr.vmem [resolvable:$true] %s145
          %148 = dma.hbm_to_vmem [thread:$0]  %s143, 32, %s146, %s134
        $region24: #{tpu_custom_call.1} parent=15 // pred_fallthru
          _
      $region16: #{tpu_custom_call.1} parent=5 // pred_fallthru
        _
      %p149 = scmp.le.s32.totalorder 1, %s14
      %p150 = scmp.lt.s32.totalorder %s14, 3
      %p151 = pnand %p149, %p150
      %p152 = pneg %p151
      // Predicated region
      $region25: #{tpu_custom_call.1} parent=5 // pred_check
        _
      $region26: #{tpu_custom_call.1} parent=5 // pred_check_branch
        %154 = sbr.rel (%p151) target = $region28
      $region27: #{tpu_custom_call.1} parent=5 // pred_region
        %s155 = ssub.s32 %s14, 1
        %s156 = sand.u32 %s27, 1
        %s157 = scalar_lea.sflag [#allocation3], %s156
        %s158 = sand.u32 %s27, 1
        %s159 = smul.addr %s158, 2
        %s160 = scalar_lea.vmem [#allocation2], %s159
        // Predicated region
        $region29: #{tpu_custom_call.1} parent=27 // pred_check
          %p161 = pneg %p40
        $region30: #{tpu_custom_call.1} parent=27 // pred_check_branch
          %163 = sbr.rel (%p161) target = $region32
        $region31: #{tpu_custom_call.1} parent=27 // pred_region
          %164 = dma.done %s157, 32
        $region32: #{tpu_custom_call.1} parent=27 // pred_fallthru
          _
        %s165 = sand.u32 %s53, 1
        %s166 = scalar_lea.sflag [#allocation5], %s165
        %s167 = sand.u32 %s53, 1
        %s168 = smul.addr %s167, 2
        %s169 = scalar_lea.vmem [#allocation4], %s168
        // Predicated region
        $region33: #{tpu_custom_call.1} parent=27 // pred_check
          %p170 = pneg %p66
        $region34: #{tpu_custom_call.1} parent=27 // pred_check_branch
          %172 = sbr.rel (%p170) target = $region36
        $region35: #{tpu_custom_call.1} parent=27 // pred_region
          %173 = dma.done %s166, 32
        $region36: #{tpu_custom_call.1} parent=27 // pred_fallthru
          _
        %s174 = sand.u32 %s27, 1
        %s175 = scalar_lea.sflag [#allocation3], %s174
        %s176 = sand.u32 %s27, 1
        %s177 = smul.addr %s176, 2
        %s178 = scalar_lea.vmem [#allocation2], %s177
        %p179 = pneg %p40
        %p180 = pneg %p37
        %s181 = sand.u32 %s53, 1
        %s182 = scalar_lea.sflag [#allocation5], %s181
        %s183 = sand.u32 %s53, 1
        %s184 = smul.addr %s183, 2
        %s185 = scalar_lea.vmem [#allocation4], %s184
        %p186 = pneg %p66
        %p187 = pneg %p63
        %p188 = pneg %p92
        %p189 = pneg %p89
        %p190 = scmp.lt.s32.totalorder %s19, 1
        %s191 = scalar_select %p190, %s19, 1
        %s192 = scalar_lea.vmem %s2, %s191
        %p193 = scmp.lt.s32.totalorder %s19, 1
        %s194 = scalar_select %p193, %s19, 1
        %s195 = scalar_lea.vmem %s2, %s194
        %v196 = vld [vmem:[%s160] sm:$0x3]
        %v197 = vld [vmem:[%s169] sm:$0x3]
        %v198 = vlaneseq
        %v199 = vand.u32 %v198, 127
        %v200 = vadd.s32 %v199, 128
        %vm201 = vcmp.gt.f32.partialorder %v196, -5e+29
        %v202 = vsel %vm201, 1, 0
        %v203 = vcvt.s32.f32 %v202
        %v205 = vlaneseq
        %v206 = vshrl.u32 %v205, 7
        %v207 = vsub.s32 0, %v206
        %v208 = vrot.slane %v197, %v207
        %v209 = vlaneseq
        %v210 = vshrl.u32 %v209, 7
        %v211 = vsub.s32 1, %v210
        %v212 = vrot.slane %v197, %v211
        %215 = vrot.lane.b32.xlu0 %v208, 1
        %v216 = vpop.permute.xlu0 %215
        %217 = vrot.lane.b32.xlu0 %v212, 1
        %v218 = vpop.permute.xlu0 %217
        %vm219 = vcmp.lt.s32.totalorder %v199, 1
        %v220 = vsel %vm219, %v216, %v218
        %v221 = vsel %vm219, %v218, %v216
        %vm222 = vcmp.ge.s32.totalorder %v199, 1
        %vm223 = vcmp.ge.s32.totalorder %v200, 1
        %v224 = vsel %vm222, %v221, 0.0
        %v225 = vsel %vm223, %v220, 0.0
        %v228 = vcombine.low %v224, %v225
        %v230 = vunpack.c.l.s4 1966171168
        %v231 = vunpack.c.0.s8 %v230
        %v232 = vlaneseq
        %v233 = vshrl.u32 %v232, 7
        %v234 = vsub.s32 %v231, %v233
        %v235 = vrot.slane %v228, %v234
        %v237 = vunpack.c.l.s4 1966171168
        %v238 = vunpack.c.0.s8 %v237
        %v239 = vlaneseq
        %v240 = vshrl.u32 %v239, 7
        %v241 = vsub.s32 %v238, %v240
        %v242 = vrot.slane %v235, %v241
        %v244 = vadd.f32 %v197, %v242
        %v246 = vlaneseq
        %v247 = vshrl.u32 %v246, 7
        %v248 = vsub.s32 0, %v247
        %v249 = vrot.slane %v244, %v248
        %v250 = vlaneseq
        %v251 = vshrl.u32 %v250, 7
        %v252 = vsub.s32 1, %v251
        %v253 = vrot.slane %v244, %v252
        %256 = vrot.lane.b32.xlu0 %v249, 2
        %v257 = vpop.permute.xlu0 %256
        %258 = vrot.lane.b32.xlu0 %v253, 2
        %v259 = vpop.permute.xlu0 %258
        %vm260 = vcmp.lt.s32.totalorder %v199, 2
        %v261 = vsel %vm260, %v257, %v259
        %v262 = vsel %vm260, %v259, %v257
        %vm263 = vcmp.ge.s32.totalorder %v199, 2
        %vm264 = vcmp.ge.s32.totalorder %v200, 2
        %v265 = vsel %vm263, %v262, 0.0
        %v266 = vsel %vm264, %v261, 0.0
        %v269 = vcombine.low %v265, %v266
        %v271 = vunpack.c.l.s4 1966171168
        %v272 = vunpack.c.0.s8 %v271
        %v273 = vlaneseq
        %v274 = vshrl.u32 %v273, 7
        %v275 = vsub.s32 %v272, %v274
        %v276 = vrot.slane %v269, %v275
        %v278 = vunpack.c.l.s4 1966171168
        %v279 = vunpack.c.0.s8 %v278
        %v280 = vlaneseq
        %v281 = vshrl.u32 %v280, 7
        %v282 = vsub.s32 %v279, %v281
        %v283 = vrot.slane %v276, %v282
        %v285 = vadd.f32 %v244, %v283
        %v287 = vlaneseq
        %v288 = vshrl.u32 %v287, 7
        %v289 = vsub.s32 0, %v288
        %v290 = vrot.slane %v285, %v289
        %v291 = vlaneseq
        %v292 = vshrl.u32 %v291, 7
        %v293 = vsub.s32 1, %v292
        %v294 = vrot.slane %v285, %v293
        %297 = vrot.lane.b32.xlu0 %v290, 4
        %v298 = vpop.permute.xlu0 %297
        %299 = vrot.lane.b32.xlu0 %v294, 4
        %v300 = vpop.permute.xlu0 %299
        %vm301 = vcmp.lt.s32.totalorder %v199, 4
        %v302 = vsel %vm301, %v298, %v300
        %v303 = vsel %vm301, %v300, %v298
        %vm304 = vcmp.ge.s32.totalorder %v199, 4
        %vm305 = vcmp.ge.s32.totalorder %v200, 4
        %v306 = vsel %vm304, %v303, 0.0
        %v307 = vsel %vm305, %v302, 0.0
        %v310 = vcombine.low %v306, %v307
        %v312 = vunpack.c.l.s4 1966171168
        %v313 = vunpack.c.0.s8 %v312
        %v314 = vlaneseq
        %v315 = vshrl.u32 %v314, 7
        %v316 = vsub.s32 %v313, %v315
        %v317 = vrot.slane %v310, %v316
        %v319 = vunpack.c.l.s4 1966171168
        %v320 = vunpack.c.0.s8 %v319
        %v321 = vlaneseq
        %v322 = vshrl.u32 %v321, 7
        %v323 = vsub.s32 %v320, %v322
        %v324 = vrot.slane %v317, %v323
        %v326 = vadd.f32 %v285, %v324
        %v328 = vlaneseq
        %v329 = vshrl.u32 %v328, 7
        %v330 = vsub.s32 0, %v329
        %v331 = vrot.slane %v326, %v330
        %v332 = vlaneseq
        %v333 = vshrl.u32 %v332, 7
        %v334 = vsub.s32 1, %v333
        %v335 = vrot.slane %v326, %v334
        %338 = vrot.lane.b32.xlu0 %v331, 8
        %v339 = vpop.permute.xlu0 %338
        %340 = vrot.lane.b32.xlu0 %v335, 8
        %v341 = vpop.permute.xlu0 %340
        %vm342 = vcmp.lt.s32.totalorder %v199, 8
        %v343 = vsel %vm342, %v339, %v341
        %v344 = vsel %vm342, %v341, %v339
        %vm345 = vcmp.ge.s32.totalorder %v199, 8
        %vm346 = vcmp.ge.s32.totalorder %v200, 8
        %v347 = vsel %vm345, %v344, 0.0
        %v348 = vsel %vm346, %v343, 0.0
        %v351 = vcombine.low %v347, %v348
        %v353 = vunpack.c.l.s4 1966171168
        %v354 = vunpack.c.0.s8 %v353
        %v355 = vlaneseq
        %v356 = vshrl.u32 %v355, 7
        %v357 = vsub.s32 %v354, %v356
        %v358 = vrot.slane %v351, %v357
        %v360 = vunpack.c.l.s4 1966171168
        %v361 = vunpack.c.0.s8 %v360
        %v362 = vlaneseq
        %v363 = vshrl.u32 %v362, 7
        %v364 = vsub.s32 %v361, %v363
        %v365 = vrot.slane %v358, %v364
        %v367 = vadd.f32 %v326, %v365
        %v369 = vlaneseq
        %v370 = vshrl.u32 %v369, 7
        %v371 = vsub.s32 0, %v370
        %v372 = vrot.slane %v367, %v371
        %v373 = vlaneseq
        %v374 = vshrl.u32 %v373, 7
        %v375 = vsub.s32 1, %v374
        %v376 = vrot.slane %v367, %v375
        %379 = vrot.lane.b32.xlu0 %v372, 16
        %v380 = vpop.permute.xlu0 %379
        %381 = vrot.lane.b32.xlu0 %v376, 16
        %v382 = vpop.permute.xlu0 %381
        %vm383 = vcmp.lt.s32.totalorder %v199, 16
        %v384 = vsel %vm383, %v380, %v382
        %v385 = vsel %vm383, %v382, %v380
        %vm386 = vcmp.ge.s32.totalorder %v199, 16
        %vm387 = vcmp.ge.s32.totalorder %v200, 16
        %v388 = vsel %vm386, %v385, 0.0
        %v389 = vsel %vm387, %v384, 0.0
        %v392 = vcombine.low %v388, %v389
        %v394 = vunpack.c.l.s4 1966171168
        %v395 = vunpack.c.0.s8 %v394
        %v396 = vlaneseq
        %v397 = vshrl.u32 %v396, 7
        %v398 = vsub.s32 %v395, %v397
        %v399 = vrot.slane %v392, %v398
        %v401 = vunpack.c.l.s4 1966171168
        %v402 = vunpack.c.0.s8 %v401
        %v403 = vlaneseq
        %v404 = vshrl.u32 %v403, 7
        %v405 = vsub.s32 %v402, %v404
        %v406 = vrot.slane %v399, %v405
        %v408 = vadd.f32 %v367, %v406
        %v410 = vlaneseq
        %v411 = vshrl.u32 %v410, 7
        %v412 = vsub.s32 0, %v411
        %v413 = vrot.slane %v408, %v412
        %v414 = vlaneseq
        %v415 = vshrl.u32 %v414, 7
        %v416 = vsub.s32 1, %v415
        %v417 = vrot.slane %v408, %v416
        %420 = vrot.lane.b32.xlu0 %v413, 32
        %v421 = vpop.permute.xlu0 %420
        %422 = vrot.lane.b32.xlu0 %v417, 32
        %v423 = vpop.permute.xlu0 %422
        %vm424 = vcmp.lt.s32.totalorder %v199, 32
        %v425 = vsel %vm424, %v421, %v423
        %v426 = vsel %vm424, %v423, %v421
        %vm427 = vcmp.ge.s32.totalorder %v199, 32
        %vm428 = vcmp.ge.s32.totalorder %v200, 32
        %v429 = vsel %vm427, %v426, 0.0
        %v430 = vsel %vm428, %v425, 0.0
        %v433 = vcombine.low %v429, %v430
        %v435 = vunpack.c.l.s4 1966171168
        %v436 = vunpack.c.0.s8 %v435
        %v437 = vlaneseq
        %v438 = vshrl.u32 %v437, 7
        %v439 = vsub.s32 %v436, %v438
        %v440 = vrot.slane %v433, %v439
        %v442 = vunpack.c.l.s4 1966171168
        %v443 = vunpack.c.0.s8 %v442
        %v444 = vlaneseq
        %v445 = vshrl.u32 %v444, 7
        %v446 = vsub.s32 %v443, %v445
        %v447 = vrot.slane %v440, %v446
        %v449 = vadd.f32 %v408, %v447
        %v451 = vlaneseq
        %v452 = vshrl.u32 %v451, 7
        %v453 = vsub.s32 0, %v452
        %v454 = vrot.slane %v449, %v453
        %v455 = vlaneseq
        %v456 = vshrl.u32 %v455, 7
        %v457 = vsub.s32 1, %v456
        %v458 = vrot.slane %v449, %v457
        %461 = vrot.lane.b32.xlu0 %v454, 64
        %v462 = vpop.permute.xlu0 %461
        %463 = vrot.lane.b32.xlu0 %v458, 64
        %v464 = vpop.permute.xlu0 %463
        %vm465 = vcmp.lt.s32.totalorder %v199, 64
        %v466 = vsel %vm465, %v462, %v464
        %v467 = vsel %vm465, %v464, %v462
        %vm468 = vcmp.ge.s32.totalorder %v199, 64
        %vm469 = vcmp.ge.s32.totalorder %v200, 64
        %v470 = vsel %vm468, %v467, 0.0
        %v471 = vsel %vm469, %v466, 0.0
        %v474 = vcombine.low %v470, %v471
        %v476 = vunpack.c.l.s4 1966171168
        %v477 = vunpack.c.0.s8 %v476
        %v478 = vlaneseq
        %v479 = vshrl.u32 %v478, 7
        %v480 = vsub.s32 %v477, %v479
        %v481 = vrot.slane %v474, %v480
        %v483 = vunpack.c.l.s4 1966171168
        %v484 = vunpack.c.0.s8 %v483
        %v485 = vlaneseq
        %v486 = vshrl.u32 %v485, 7
        %v487 = vsub.s32 %v484, %v486
        %v488 = vrot.slane %v481, %v487
        %v490 = vadd.f32 %v449, %v488
        %v492 = vlaneseq
        %v493 = vshrl.u32 %v492, 7
        %v494 = vsub.s32 0, %v493
        %v495 = vrot.slane %v490, %v494
        %v496 = vlaneseq
        %v497 = vshrl.u32 %v496, 7
        %v498 = vsub.s32 1, %v497
        %v499 = vrot.slane %v490, %v498
        %vm502 = vcmp.ge.s32.totalorder %v199, 128
        %vm503 = vcmp.ge.s32.totalorder %v200, 128
        %v504 = vsel %vm502, %v499, 0.0
        %v505 = vsel %vm503, %v495, 0.0
        %v508 = vcombine.low %v504, %v505
        %v510 = vunpack.c.l.s4 1966171168
        %v511 = vunpack.c.0.s8 %v510
        %v512 = vlaneseq
        %v513 = vshrl.u32 %v512, 7
        %v514 = vsub.s32 %v511, %v513
        %v515 = vrot.slane %v508, %v514
        %v517 = vunpack.c.l.s4 1966171168
        %v518 = vunpack.c.0.s8 %v517
        %v519 = vlaneseq
        %v520 = vshrl.u32 %v519, 7
        %v521 = vsub.s32 %v518, %v520
        %v522 = vrot.slane %v515, %v521
        %v524 = vadd.f32 %v490, %v522
        %v526 = vlaneseq
        %v527 = vshrl.u32 %v526, 7
        %v528 = vsub.s32 0, %v527
        %v529 = vrot.slane %v203, %v528
        %v530 = vlaneseq
        %v531 = vshrl.u32 %v530, 7
        %v532 = vsub.s32 1, %v531
        %v533 = vrot.slane %v203, %v532
        %vm536 = vcmask 1040384
        %v537 = vsel %vm536, %v529, 0.0
        %v538 = vsel %vm536, %v533, 0.0
        %v539 = vadd.f32 %v537, %v538
        %540 = vadd.xlane.f32.xlu0 %v539
        %v541 = vpop.xlane.xlu0 %540
        %v542 = vsel %vm536, %v208, 0.0
        %v543 = vsel %vm536, %v212, 0.0
        %v544 = vadd.f32 %v542, %v543
        %545 = vadd.xlane.f32.xlu0 %v544
        %v546 = vpop.xlane.xlu0 %545
        %v547 = vadd.s32 %v199, 1
        %v548 = vadd.s32 %v200, 1
        %v549 = vcvt.s32.f32 %v547
        %v550 = vcvt.s32.f32 %v548
        %v551 = vmin.f32 %v549, %v541
        %v552 = vmin.f32 %v550, %v541
        %v554 = vlaneseq
        %v555 = vshrl.u32 %v554, 7
        %v556 = vsub.s32 0, %v555
        %v557 = vrot.slane %v524, %v556
        %v558 = vlaneseq
        %v559 = vshrl.u32 %v558, 7
        %v560 = vsub.s32 1, %v559
        %v561 = vrot.slane %v524, %v560
        %v564 = vsub.f32 %v551, %v557
        %v565 = vsub.f32 %v552, %v561
        %v566 = vsub.f32 %v546, %v557
        %v567 = vsub.f32 %v546, %v561
        %v568 = vadd.f32 %v546, %v564
        %v569 = vadd.f32 %v546, %v565
        %v570 = vmax.f32 %v568, 1.0
        %v571 = vmax.f32 %v569, 1.0
        %v572 = vrcp.pop %v570
        %v573 = vrcp.pop %v571
        %v574 = vmul.f32 %v566, %v572
        %v575 = vmul.f32 %v567, %v573
        %v576 = vsub.f32 1.0, %v574
        %v577 = vsub.f32 1.0, %v575
        %578 = vrot.lane.b32.xlu0 %v576, 1
        %v579 = vpop.permute.xlu0 %578
        %580 = vrot.lane.b32.xlu0 %v577, 1
        %v581 = vpop.permute.xlu0 %580
        %v582 = vsel %vm219, %v579, %v581
        %v583 = vsel %vm219, %v581, %v579
        %vm584 = vcmp.eq.s32.totalorder %v199, 0
        %vm585 = vcmp.eq.s32.totalorder %v200, 0
        %v586 = vsel %vm584, 0.0, %v583
        %v587 = vsel %vm585, 0.0, %v582
        %v588 = vsub.f32 %v576, %v586
        %v589 = vsub.f32 %v577, %v587
        %v590 = vmax.f32 %v196, 0.0
        %v593 = vcombine.low %v588, %v589
        %v595 = vunpack.c.l.s4 1966171168
        %v596 = vunpack.c.0.s8 %v595
        %v597 = vlaneseq
        %v598 = vshrl.u32 %v597, 7
        %v599 = vsub.s32 %v596, %v598
        %v600 = vrot.slane %v593, %v599
        %v602 = vunpack.c.l.s4 1966171168
        %v603 = vunpack.c.0.s8 %v602
        %v604 = vlaneseq
        %v605 = vshrl.u32 %v604, 7
        %v606 = vsub.s32 %v603, %v605
        %v607 = vrot.slane %v600, %v606
        %v609 = vmul.f32 %v590, %v607
        %v611 = vlaneseq
        %v612 = vshrl.u32 %v611, 7
        %v613 = vsub.s32 0, %v612
        %v614 = vrot.slane %v609, %v613
        %v615 = vlaneseq
        %v616 = vshrl.u32 %v615, 7
        %v617 = vsub.s32 1, %v616
        %v618 = vrot.slane %v609, %v617
        %v621 = vsel %vm536, %v614, 0.0
        %v622 = vsel %vm536, %v618, 0.0
        %v623 = vadd.f32 %v621, %v622
        %624 = vadd.xlane.f32.xlu0 %v623
        %v625 = vpop.xlane.xlu0 %624
        %vm626 = vcmask 0
        %627 = vst.msk [vmem:[%s195] sm:$0x1] %vm626, %v625
        %p628 = scmp.lt.s32.totalorder %s19, 1
        %s629 = scalar_select %p628, %s19, 1
        %s630 = scalar_lea.vmem %s2, %s629
        // Predicated region
        $region37: #{tpu_custom_call.1} parent=27 // pred_check
          %p631 = pneg %p89
        $region38: #{tpu_custom_call.1} parent=27 // pred_check_branch
          %633 = sbr.rel (%p631) target = $region40
        $region39: #{tpu_custom_call.1} parent=27 // pred_region
          _
        $region40: #{tpu_custom_call.1} parent=27 // pred_fallthru
          _
      $region28: #{tpu_custom_call.1} parent=5 // pred_fallthru
        _
      %p634 = scmp.le.s32.totalorder 2, %s14
      // Predicated region
      $region41: #{tpu_custom_call.1} parent=5 // pred_check
        %p635 = pneg %p634
      $region42: #{tpu_custom_call.1} parent=5 // pred_check_branch
        %637 = sbr.rel (%p635) target = $region44
      $region43: #{tpu_custom_call.1} parent=5 // pred_region
        %s638 = ssub.s32 %s14, 2
        // Predicated region
        $region45: #{tpu_custom_call.1} parent=43 // pred_check
          %p639 = pneg %p95
        $region46: #{tpu_custom_call.1} parent=43 // pred_check_branch
          %641 = sbr.rel (%p639) target = $region48
        $region47: #{tpu_custom_call.1} parent=43 // pred_region
          %p642 = scmp.lt.s32.totalorder %s20, 1
          %s643 = scalar_select %p642, %s20, 1
          %s644 = scalar_lea.vmem %s2, %s643
        $region48: #{tpu_custom_call.1} parent=43 // pred_fallthru
          _
      $region44: #{tpu_custom_call.1} parent=5 // pred_fallthru
        _
    $region6: #{tpu_custom_call.1} parent=1 // loop_footer
      %s18 = sadd.s32 1, %s14
    $region7: #{tpu_custom_call.1} parent=1 // loop_footer_branch
      %13 = sbr.rel target = $region3
    $region8: #{tpu_custom_call.1} parent=1 // loop_exit
      _
    %645 = vsyncpa [#allocation3], 1
    %s646 = scalar_lea.sflag [#allocation3], 1
    %647 = vsyncpa %s646, 1
    %648 = vsyncpa [#allocation5], 1
    %s649 = scalar_lea.sflag [#allocation5], 1
    %650 = vsyncpa %s649, 1

</llo_original>
